<compile_context>
chip_gen: v7x
topology: tpu7x:2x2x1
jax: 0.10.0
libtpu: 0.0.40
codegen_flags: <defaults>
</compile_context>

<pallas_src>
import functools

import jax
import jax.numpy as jnp
from jax import lax
from jax.experimental import pallas as pl
from jax.experimental.pallas import tpu as pltpu


def _yolo_kernel(x_ref, mult_ref, add_ref, o_ref, *, C, GGp):
    p = x_ref[...]                                        # (A, C, GGp) f32
    row = lax.broadcasted_iota(jnp.int32, (C, GGp), 0)    # sublane (channel) index
    is_exp = jnp.logical_and(row >= 2, row < 4)           # tw / th rows
    sg = pl.reciprocal(1.0 + jnp.exp(-p), approx=True)    # sigmoid via EUP recip
    ex = jnp.exp(p)
    val = jnp.where(is_exp, ex, sg)                       # (A, C, GGp)
    # rows 0,1: sig*stride + grid_off*stride ; rows 2,3: exp*anchor ; rows >=4: sig
    o_ref[...] = val * mult_ref[...] + add_ref[...]


def yolo_head_pallas(x, anchors, num_classes, img_size=416):
    """x: [B, A*(num_classes+5), G, G] float32 (NCHW). Returns ([B, A*G*G, 5+nc], 0)."""
    B, ch, G, G2 = x.shape
    assert G == G2
    A = len(anchors)
    C = num_classes + 5
    assert ch == A * C
    stride = float(img_size) / float(G)
    GG = G * G
    GGp = ((GG + 127) // 128) * 128          # lane-align the spatial axis

    # glue: NCHW -> [B, A, C, GG] (row-major spatial flatten, same as torch .view),
    # then zero-pad the lane axis; pad lanes are sliced off after the kernel.
    xr = x.reshape(B, A, C, GG).astype(jnp.float32)
    if GGp != GG:
        xr = jnp.pad(xr, ((0, 0), (0, 0), (0, 0), (0, GGp - GG)))

    # additive table (C, GGp): row 0 = cx*stride, row 1 = cy*stride, else 0
    k = jnp.arange(GG, dtype=jnp.int32)
    gx = (k % G).astype(jnp.float32) * stride
    gy = (k // G).astype(jnp.float32) * stride
    add_tab = jnp.zeros((C, GGp), jnp.float32)
    add_tab = add_tab.at[0, :GG].set(gx)
    add_tab = add_tab.at[1, :GG].set(gy)

    # multiplicative table (A, C, 1): rows 0/1 -> stride, rows 2/3 -> raw anchors, else 1
    anc = jnp.asarray(anchors, dtype=jnp.float32)          # (A, 2) raw pixel anchors
    mult_tab = jnp.ones((A, C, 1), jnp.float32)
    mult_tab = mult_tab.at[:, 0, 0].set(stride)
    mult_tab = mult_tab.at[:, 1, 0].set(stride)
    mult_tab = mult_tab.at[:, 2, 0].set(anc[:, 0])
    mult_tab = mult_tab.at[:, 3, 0].set(anc[:, 1])

    kernel = functools.partial(_yolo_kernel, C=C, GGp=GGp)

    out = pl.pallas_call(
        kernel,
        out_shape=jax.ShapeDtypeStruct((B, A, C, GGp), jnp.float32),
        grid_spec=pltpu.PrefetchScalarGridSpec(
            num_scalar_prefetch=0,
            grid=(B,),
            in_specs=[
                pl.BlockSpec((pl.Squeezed(), A, C, GGp), lambda b: (b, 0, 0, 0)),
                pl.BlockSpec((A, C, 1), lambda b: (0, 0, 0)),   # reused every step
                pl.BlockSpec((C, GGp), lambda b: (0, 0)),       # reused every step
            ],
            out_specs=pl.BlockSpec(
                (pl.Squeezed(), A, C, GGp), lambda b: (b, 0, 0, 0)
            ),
        ),
        compiler_params=pltpu.CompilerParams(
            dimension_semantics=("parallel",)
        ),
    )(xr, mult_tab, add_tab)

    # glue: [B, A, C, GGp] -> drop pad -> [B, A, GG, C] -> [B, A*GG, C]
    # (matches torch.cat(...).view; C<128 makes this layout masked-store-bound
    #  regardless of where the transpose happens).
    output = out[:, :, :, :GG].transpose(0, 1, 3, 2).reshape(B, A * GG, C)
    return output, 0


def yolo_head_ref(x, anchors, num_classes, img_size=416):
    """Pure-JAX reference of the same forward (mirrors the torch module) for validation."""
    B, ch, G, _ = x.shape
    A = len(anchors)
    C = num_classes + 5
    stride = float(img_size) / float(G)
    pred = x.reshape(B, A, C, G, G).transpose(0, 1, 3, 4, 2)  # (B,A,G,G,C)
    grid_x = jnp.arange(G, dtype=jnp.float32).reshape(1, 1, 1, G)
    grid_y = jnp.arange(G, dtype=jnp.float32).reshape(1, 1, G, 1)
    scaled = jnp.array(
        [(aw / stride, ah / stride) for (aw, ah) in anchors], dtype=jnp.float32
    )
    anchor_w = scaled[:, 0].reshape(1, A, 1, 1)
    anchor_h = scaled[:, 1].reshape(1, A, 1, 1)
    bx = jax.nn.sigmoid(pred[..., 0]) + grid_x
    by = jax.nn.sigmoid(pred[..., 1]) + grid_y
    bw = jnp.exp(pred[..., 2]) * anchor_w
    bh = jnp.exp(pred[..., 3]) * anchor_h
    conf = jax.nn.sigmoid(pred[..., 4])
    cls = jax.nn.sigmoid(pred[..., 5:])
    boxes = jnp.stack([bx, by, bw, bh], axis=-1)
    out = jnp.concatenate(
        [
            boxes.reshape(B, -1, 4) * stride,
            conf.reshape(B, -1, 1),
            cls.reshape(B, -1, num_classes),
        ],
        axis=-1,
    )
    return out


if __name__ == "__main__":
    key = jax.random.PRNGKey(0)
    num_classes = 4
    anchors = [(10.0, 13.0), (16.0, 30.0), (33.0, 23.0)]  # A = 3
    A = len(anchors)
    C = num_classes + 5  # 9
    img_size = 416

    # (B, G) = (2, 16): lane-aligned GG; (2, 13): exercises the GG->128 padding path.
    for (B, G) in [(2, 16), (2, 13)]:
        key, sub = jax.random.split(key)
        x = jax.random.normal(sub, (B, A * C, G, G), dtype=jnp.float32)

        out, zero = yolo_head_pallas(x, anchors, num_classes, img_size=img_size)
        out = jax.block_until_ready(out)

        ref = yolo_head_ref(x, anchors, num_classes, img_size=img_size)
        assert out.shape == (B, A * G * G, C), out.shape
        assert zero == 0
        max_err = float(jnp.max(jnp.abs(out - ref)))
        # tolerance accounts for the EUP approximate reciprocal in the in-kernel
        # sigmoid, whose error is scaled by stride (=img_size/G) on the box rows.
        assert jnp.allclose(out, ref, atol=5e-2, rtol=5e-3), max_err

    print("KERNEL_OK")
</pallas_src>

<mosaic_0001>
module attributes {stable_mosaic.version = 11 : i64} {
  func.func @_yolo_kernel(%arg0: i32, %arg1: memref<1x3x9x256xf32, #tpu.memory_space<vmem>>, %arg2: memref<3x9x1xf32, #tpu.memory_space<vmem>>, %arg3: memref<9x256xf32, #tpu.memory_space<vmem>>, %arg4: memref<1x3x9x256xf32, #tpu.memory_space<vmem>>) attributes {dimension_semantics = [#tpu.dimension_semantics<parallel>], iteration_bounds = array<i64: 2>, scalar_prefetch = 0 : i64, scratch_operands = 0 : i64, tpu.core_type = #tpu.core_type<tc>, window_params = [{transform_indices = @transform_0, window_bounds = array<i64: 1, 3, 9, 256>}, {pipeline_mode = #tpu.pipeline_mode<synchronous>, transform_indices = @transform_1, window_bounds = array<i64: 3, 9, 1>}, {pipeline_mode = #tpu.pipeline_mode<synchronous>, transform_indices = @transform_2, window_bounds = array<i64: 9, 256>}, {transform_indices = @transform_3, window_bounds = array<i64: 1, 3, 9, 256>}]} {
    %c0 = arith.constant 0 : index
    %c0_0 = arith.constant 0 : index
    %c0_1 = arith.constant 0 : index
    %c0_2 = arith.constant 0 : index
    %0 = vector.load %arg1[%c0, %c0_0, %c0_1, %c0_2] : memref<1x3x9x256xf32, #tpu.memory_space<vmem>>, vector<1x3x9x256xf32>
    %1 = vector.shape_cast %0 : vector<1x3x9x256xf32> to vector<3x9x256xf32>
    %2 = tpu.iota {dimensions = array<i32: 0>} : vector<9x256xi32>
    %c2_i32 = arith.constant 2 : i32
    %3 = vector.broadcast %c2_i32 : i32 to vector<9x256xi32>
    %4 = arith.cmpi sge, %2, %3 : vector<9x256xi32>
    %c4_i32 = arith.constant 4 : i32
    %5 = vector.broadcast %c4_i32 : i32 to vector<9x256xi32>
    %6 = arith.cmpi slt, %2, %5 : vector<9x256xi32>
    %7 = arith.andi %4, %6 : vector<9x256xi1>
    %cst = arith.constant 0.000000e+00 : f32
    %8 = vector.broadcast %cst : f32 to vector<3x9x256xf32>
    %9 = arith.subf %8, %1 : vector<3x9x256xf32>
    %10 = math.exp %9 : vector<3x9x256xf32>
    %cst_3 = arith.constant 1.000000e+00 : f32
    %11 = vector.broadcast %cst_3 : f32 to vector<3x9x256xf32>
    %12 = arith.addf %11, %10 : vector<3x9x256xf32>
    %13 = tpu.reciprocal %12 {approx = true} : vector<3x9x256xf32> -> vector<3x9x256xf32>
    %14 = math.exp %1 : vector<3x9x256xf32>
    %15 = vector.shape_cast %7 : vector<9x256xi1> to vector<1x9x256xi1>
    %16 = vector.broadcast %15 : vector<1x9x256xi1> to vector<3x9x256xi1>
    %17 = arith.select %16, %14, %13 : vector<3x9x256xi1>, vector<3x9x256xf32>
    %c0_4 = arith.constant 0 : index
    %c0_5 = arith.constant 0 : index
    %c0_6 = arith.constant 0 : index
    %18 = vector.load %arg2[%c0_4, %c0_5, %c0_6] : memref<3x9x1xf32, #tpu.memory_space<vmem>>, vector<3x9x1xf32>
    %19 = vector.broadcast %18 : vector<3x9x1xf32> to vector<3x9x256xf32>
    %20 = arith.mulf %17, %19 : vector<3x9x256xf32>
    %c0_7 = arith.constant 0 : index
    %c0_8 = arith.constant 0 : index
    %21 = vector.load %arg3[%c0_7, %c0_8] : memref<9x256xf32, #tpu.memory_space<vmem>>, vector<9x256xf32>
    %22 = vector.shape_cast %21 : vector<9x256xf32> to vector<1x9x256xf32>
    %23 = vector.broadcast %22 : vector<1x9x256xf32> to vector<3x9x256xf32>
    %24 = arith.addf %20, %23 : vector<3x9x256xf32>
    %c0_9 = arith.constant 0 : index
    %c0_10 = arith.constant 0 : index
    %c0_11 = arith.constant 0 : index
    %c0_12 = arith.constant 0 : index
    %25 = vector.load %arg4[%c0_9, %c0_10, %c0_11, %c0_12] : memref<1x3x9x256xf32, #tpu.memory_space<vmem>>, vector<1x3x9x256xf32>
    %26 = vector.shape_cast %25 : vector<1x3x9x256xf32> to vector<3x9x256xf32>
    %27 = vector.shape_cast %24 : vector<3x9x256xf32> to vector<1x3x9x256xf32>
    tpu.vector_store %arg4[%c0_9, %c0_10, %c0_11, %c0_12], %27 {strides = array<i32>} : memref<1x3x9x256xf32, #tpu.memory_space<vmem>>, vector<1x3x9x256xf32>,
    return
  }
  func.func @transform_0(%arg0: i32) -> (i32, i32, i32, i32) {
    %c0_i32 = arith.constant 0 : i32
    %c0_i32_0 = arith.constant 0 : i32
    %c0_i32_1 = arith.constant 0 : i32
    %c0_i32_2 = arith.constant 0 : i32
    return %arg0, %c0_i32, %c0_i32_0, %c0_i32_1 : i32, i32, i32, i32
  }
  func.func @transform_1(%arg0: i32) -> (i32, i32, i32) {
    %c0_i32 = arith.constant 0 : i32
    %c0_i32_0 = arith.constant 0 : i32
    %c0_i32_1 = arith.constant 0 : i32
    %c0_i32_2 = arith.constant 0 : i32
    return %c0_i32, %c0_i32_0, %c0_i32_1 : i32, i32, i32
  }
  func.func @transform_2(%arg0: i32) -> (i32, i32) {
    %c0_i32 = arith.constant 0 : i32
    %c0_i32_0 = arith.constant 0 : i32
    %c0_i32_1 = arith.constant 0 : i32
    return %c0_i32, %c0_i32_0 : i32, i32
  }
  func.func @transform_3(%arg0: i32) -> (i32, i32, i32, i32) {
    %c0_i32 = arith.constant 0 : i32
    %c0_i32_0 = arith.constant 0 : i32
    %c0_i32_1 = arith.constant 0 : i32
    %c0_i32_2 = arith.constant 0 : i32
    return %arg0, %c0_i32, %c0_i32_0, %c0_i32_1 : i32, i32, i32, i32
  }
}

</mosaic_0001>

<llo_original>
// kernel: tpu_custom_call.1
$region0: #{tpu_custom_call.1}
  #allocation0 [shape = 'u32[]', space=smem, size = 0x4, offset = 0x4, fixed_abs, tag = 'smem constant byte address 0x4 - core index']
  #allocation1 [shape = 'u32[144,128]{1,0:T(1,128)}', space=vmem, size = 0x12000, scoped, tag = 'internal scratch']
  %s0 = inlined_call_operand.vmem [shape: f32[2,3,9,256], index: 0, kind: input, shape index: {}]
  %s1 = inlined_call_operand.vmem [shape: f32[3,9,1], index: 1, kind: input, shape index: {}]
  %s2 = inlined_call_operand.vmem [shape: f32[9,256], index: 2, kind: input, shape index: {}]
  %s3 = inlined_call_operand.vmem [shape: f32[2,3,9,256], index: 3, kind: output, shape index: {}]
  %s4 = sld [smem:[#allocation0]]
  $region45: #{tpu_custom_call.1} parent=0
    _
  %s6 = ssub.s32 1, %s4
  %s7 = scalar_select 0, %s6, %s4
  loop: start=0, step=1, limit=4
  $region2: #{tpu_custom_call.1} parent=0 // loop_pre_header
    _
  $region3: #{tpu_custom_call.1} parent=0 // loop_header
    %s9 = sphi 0, %s13
    %p10 = scmp.ge.s32.totalorder %s9, 4
    %s19 = sphi 0, %s21
    %s22 = sphi 0, %s19
    %s23 = sphi 0, %s22
    %s39 = sphi 0, %s23
    %s43 = sphi 0, %s43
    %s45 = sphi 0, %s43
    %s46 = sphi 0, %s45
    %s60 = sphi 0, %s46
    %s64 = sphi 0, %s64
    %s66 = sphi 0, %s64
    %s67 = sphi 0, %s66
    %s81 = sphi 0, %s67
    %s87 = sphi 0, %s89
    %s90 = sphi 0, %s87
    %s91 = sphi 0, %s90
    %s107 = sphi 0, %s91
  $region4: #{tpu_custom_call.1} parent=0 // loop_header_branch
    %12 = sbr.rel (%p10) target = $region8
  $region5: #{tpu_custom_call.1} parent=0 // loop_body
    %s14 = ssub.s32 %s9, 1
    %s15 = ssub.s32 %s9, 2
    %s16 = sadd.s32 %s9, 1
    %s17 = ssub.s32 %s9, %s16
    %p18 = scmp.eq.s32.totalorder %s17, 0
    %s20 = sadd.s32 %s19, 1
    %s21 = scalar_select %p18, %s19, %s20
    %p24 = pneg %p18
    %p25 = scmp.eq.s32.totalorder %s9, 1
    %p26 = por %p24, %p25
    %p27 = scmp.ne.s32.totalorder %s19, %s22
    %p28 = scmp.eq.s32.totalorder %s9, 0
    %p29 = por %p27, %p28
    %p30 = scmp.ne.s32.totalorder %s19, %s22
    %p31 = scmp.eq.s32.totalorder %s14, 1
    %p32 = por %p30, %p31
    %p33 = scmp.ne.s32.totalorder %s22, %s23
    %p34 = scmp.eq.s32.totalorder %s14, 0
    %p35 = por %p33, %p34
    %p36 = scmp.ne.s32.totalorder %s22, %s23
    %p37 = scmp.eq.s32.totalorder %s15, 1
    %p38 = por %p36, %p37
    %p40 = scmp.ne.s32.totalorder %s23, %s39
    %p41 = scmp.eq.s32.totalorder %s15, 0
    %p42 = por %p40, %p41
    %s44 = sadd.s32 %s43, 1
    %p47 = scmp.eq.s32.totalorder %s9, 1
    %p48 = scmp.ne.s32.totalorder %s43, %s45
    %p49 = scmp.eq.s32.totalorder %s9, 0
    %p50 = por %p48, %p49
    %p51 = scmp.ne.s32.totalorder %s43, %s45
    %p52 = scmp.eq.s32.totalorder %s14, 1
    %p53 = por %p51, %p52
    %p54 = scmp.ne.s32.totalorder %s45, %s46
    %p55 = scmp.eq.s32.totalorder %s14, 0
    %p56 = por %p54, %p55
    %p57 = scmp.ne.s32.totalorder %s45, %s46
    %p58 = scmp.eq.s32.totalorder %s15, 1
    %p59 = por %p57, %p58
    %p61 = scmp.ne.s32.totalorder %s46, %s60
    %p62 = scmp.eq.s32.totalorder %s15, 0
    %p63 = por %p61, %p62
    %s65 = sadd.s32 %s64, 1
    %p68 = scmp.eq.s32.totalorder %s9, 1
    %p69 = scmp.ne.s32.totalorder %s64, %s66
    %p70 = scmp.eq.s32.totalorder %s9, 0
    %p71 = por %p69, %p70
    %p72 = scmp.ne.s32.totalorder %s64, %s66
    %p73 = scmp.eq.s32.totalorder %s14, 1
    %p74 = por %p72, %p73
    %p75 = scmp.ne.s32.totalorder %s66, %s67
    %p76 = scmp.eq.s32.totalorder %s14, 0
    %p77 = por %p75, %p76
    %p78 = scmp.ne.s32.totalorder %s66, %s67
    %p79 = scmp.eq.s32.totalorder %s15, 1
    %p80 = por %p78, %p79
    %p82 = scmp.ne.s32.totalorder %s67, %s81
    %p83 = scmp.eq.s32.totalorder %s15, 0
    %p84 = por %p82, %p83
    %s85 = ssub.s32 %s9, %s16
    %p86 = scmp.eq.s32.totalorder %s85, 0
    %s88 = sadd.s32 %s87, 1
    %s89 = scalar_select %p86, %s87, %s88
    %p92 = pneg %p86
    %p93 = scmp.eq.s32.totalorder %s9, 1
    %p94 = por %p92, %p93
    %p95 = scmp.ne.s32.totalorder %s87, %s90
    %p96 = scmp.eq.s32.totalorder %s9, 0
    %p97 = por %p95, %p96
    %p98 = scmp.ne.s32.totalorder %s87, %s90
    %p99 = scmp.eq.s32.totalorder %s14, 1
    %p100 = por %p98, %p99
    %p101 = scmp.ne.s32.totalorder %s90, %s91
    %p102 = scmp.eq.s32.totalorder %s14, 0
    %p103 = por %p101, %p102
    %p104 = scmp.ne.s32.totalorder %s90, %s91
    %p105 = scmp.eq.s32.totalorder %s15, 1
    %p106 = por %p104, %p105
    %p108 = scmp.ne.s32.totalorder %s91, %s107
    %p109 = scmp.eq.s32.totalorder %s15, 0
    %p110 = por %p108, %p109
    %p111 = scmp.le.s32.totalorder 1, %s9
    %p112 = scmp.lt.s32.totalorder %s9, 3
    %p113 = pnand %p111, %p112
    %p114 = pneg %p113
    // Predicated region
    $region9: #{tpu_custom_call.1} parent=5 // pred_check
      _
    $region10: #{tpu_custom_call.1} parent=5 // pred_check_branch
      %116 = sbr.rel (%p113) target = $region12
    $region11: #{tpu_custom_call.1} parent=5 // pred_region
      %s117 = ssub.s32 %s9, 1
      // Predicated region
      $region13: #{tpu_custom_call.1} parent=11 // pred_check
        %p118 = pneg %p56
      $region14: #{tpu_custom_call.1} parent=11 // pred_check_branch
        %120 = sbr.rel (%p118) target = $region16
      $region15: #{tpu_custom_call.1} parent=11 // pred_region
        _
      $region16: #{tpu_custom_call.1} parent=11 // pred_fallthru
        _
      // Predicated region
      $region17: #{tpu_custom_call.1} parent=11 // pred_check
        %p121 = pneg %p77
      $region18: #{tpu_custom_call.1} parent=11 // pred_check_branch
        %123 = sbr.rel (%p121) target = $region20
      $region19: #{tpu_custom_call.1} parent=11 // pred_region
        _
      $region20: #{tpu_custom_call.1} parent=11 // pred_fallthru
        _
    $region12: #{tpu_custom_call.1} parent=5 // pred_fallthru
      _
    %p124 = scmp.lt.s32.totalorder %s9, 2
    // Predicated region
    $region21: #{tpu_custom_call.1} parent=5 // pred_check
      %p125 = pneg %p124
    $region22: #{tpu_custom_call.1} parent=5 // pred_check_branch
      %127 = sbr.rel (%p125) target = $region24
    $region23: #{tpu_custom_call.1} parent=5 // pred_region
      // Predicated region
      $region25: #{tpu_custom_call.1} parent=23 // pred_check
        %p128 = pneg %p29
      $region26: #{tpu_custom_call.1} parent=23 // pred_check_branch
        %130 = sbr.rel (%p128) target = $region28
      $region27: #{tpu_custom_call.1} parent=23 // pred_region
        %p131 = scmp.lt.s32.totalorder %s9, 1
        %s132 = scalar_select %p131, %s9, 1
        %s133 = smul.addr %s132, 12
        %s134 = smul.addr %s133, 8
        %s135 = scalar_lea.vmem %s0, %s134
      $region28: #{tpu_custom_call.1} parent=23 // pred_fallthru
        _
    $region24: #{tpu_custom_call.1} parent=5 // pred_fallthru
      _
    %p136 = scmp.le.s32.totalorder 1, %s9
    %p137 = scmp.lt.s32.totalorder %s9, 3
    %p138 = pnand %p136, %p137
    %p139 = pneg %p138
    // Predicated region
    $region29: #{tpu_custom_call.1} parent=5 // pred_check
      _
    $region30: #{tpu_custom_call.1} parent=5 // pred_check_branch
      %141 = sbr.rel (%p138) target = $region32
    $region31: #{tpu_custom_call.1} parent=5 // pred_region
      %s142 = ssub.s32 %s9, 1
      %p143 = scmp.lt.s32.totalorder %s14, 1
      %s144 = scalar_select %p143, %s14, 1
      %s145 = smul.addr %s144, 12
      %s146 = smul.addr %s145, 8
      %s147 = scalar_lea.vmem %s0, %s146
      %p148 = pneg %p35
      %p149 = pneg %p32
      %p150 = pneg %p56
      %p151 = pneg %p53
      %p152 = pneg %p77
      %p153 = pneg %p74
      %p154 = pneg %p103
      %p155 = pneg %p100
      %p156 = scmp.lt.s32.totalorder %s14, 1
      %s157 = scalar_select %p156, %s14, 1
      %s158 = smul.addr %s157, 12
      %s159 = smul.addr %s158, 8
      %s160 = scalar_lea.vmem %s3, %s159
      %p161 = scmp.lt.s32.totalorder %s14, 1
      %s162 = scalar_select %p161, %s14, 1
      %s163 = smul.addr %s162, 12
      %s164 = smul.addr %s163, 8
      %s165 = scalar_lea.vmem %s0, %s164
      %p166 = scmp.lt.s32.totalorder %s14, 1
      %s167 = scalar_select %p166, %s14, 1
      %s168 = smul.addr %s167, 12
      %s169 = smul.addr %s168, 8
      %s170 = scalar_lea.vmem %s3, %s169
      %v171 = vld [vmem:[%s165] sm:$0xff]
      %v172 = vld [vmem:[%s165 + $0x8] sm:$0xff]
      %v173 = vld [vmem:[%s165 + $0x10] sm:$0x1]
      %v174 = vld [vmem:[%s165 + $0x18] sm:$0x1]
      %v175 = vld [vmem:[%s165 + $0x20] sm:$0xff]
      %v176 = vld [vmem:[%s165 + $0x28] sm:$0xff]
      %v177 = vld [vmem:[%s165 + $0x30] sm:$0x1]
      %v178 = vld [vmem:[%s165 + $0x38] sm:$0x1]
      %v179 = vld [vmem:[%s165 + $0x40] sm:$0xff]
      %v180 = vld [vmem:[%s165 + $0x48] sm:$0xff]
      %v181 = vld [vmem:[%s165 + $0x50] sm:$0x1]
      %v182 = vld [vmem:[%s165 + $0x58] sm:$0x1]
      %v183 = vlaneseq
      %v184 = vshrl.u32 %v183, 7
      %v185 = vadd.s32 %v184, 8
      %vm186 = vcmp.ge.s32.totalorder %v184, 2
      %vm187 = vcmp.ge.s32.totalorder %v185, 2
      %vm188 = vcmp.lt.s32.totalorder %v184, 4
      %vm189 = vcmp.lt.s32.totalorder %v185, 4
      %vm190 = vmand %vm186, %vm188
      %vm191 = vmand %vm187, %vm189
      %v192 = vsub.f32 0.0, %v171
      %v193 = vsub.f32 0.0, %v172
      %v194 = vsub.f32 0.0, %v173
      %v195 = vsub.f32 0.0, %v174
      %v196 = vsub.f32 0.0, %v175
      %v197 = vsub.f32 0.0, %v176
      %v198 = vsub.f32 0.0, %v177
      %v199 = vsub.f32 0.0, %v178
      %v200 = vsub.f32 0.0, %v179
      %v201 = vsub.f32 0.0, %v180
      %v202 = vsub.f32 0.0, %v181
      %v203 = vsub.f32 0.0, %v182
      %v204 = vmul.f32 %v192, 1.442695
      %v205 = vpow.pop %v204
      %v206 = vmul.f32 %v193, 1.442695
      %v207 = vpow.pop %v206
      %v208 = vmul.f32 %v194, 1.442695
      %v209 = vpow.pop %v208
      %v210 = vmul.f32 %v195, 1.442695
      %v211 = vpow.pop %v210
      %v212 = vmul.f32 %v196, 1.442695
      %v213 = vpow.pop %v212
      %v214 = vmul.f32 %v197, 1.442695
      %v215 = vpow.pop %v214
      %v216 = vmul.f32 %v198, 1.442695
      %v217 = vpow.pop %v216
      %v218 = vmul.f32 %v199, 1.442695
      %v219 = vpow.pop %v218
      %v220 = vmul.f32 %v200, 1.442695
      %v221 = vpow.pop %v220
      %v222 = vmul.f32 %v201, 1.442695
      %v223 = vpow.pop %v222
      %v224 = vmul.f32 %v202, 1.442695
      %v225 = vpow.pop %v224
      %v226 = vmul.f32 %v203, 1.442695
      %v227 = vpow.pop %v226
      %v228 = vadd.f32 %v205, 1.0
      %v229 = vadd.f32 %v207, 1.0
      %v230 = vadd.f32 %v209, 1.0
      %v231 = vadd.f32 %v211, 1.0
      %v232 = vadd.f32 %v213, 1.0
      %v233 = vadd.f32 %v215, 1.0
      %v234 = vadd.f32 %v217, 1.0
      %v235 = vadd.f32 %v219, 1.0
      %v236 = vadd.f32 %v221, 1.0
      %v237 = vadd.f32 %v223, 1.0
      %v238 = vadd.f32 %v225, 1.0
      %v239 = vadd.f32 %v227, 1.0
      %v240 = vrcp.pop %v228
      %v241 = vrcp.pop %v229
      %v242 = vrcp.pop %v230
      %v243 = vrcp.pop %v231
      %v244 = vrcp.pop %v232
      %v245 = vrcp.pop %v233
      %v246 = vrcp.pop %v234
      %v247 = vrcp.pop %v235
      %v248 = vrcp.pop %v236
      %v249 = vrcp.pop %v237
      %v250 = vrcp.pop %v238
      %v251 = vrcp.pop %v239
      %v252 = vmul.f32 %v171, 1.442695
      %v253 = vpow.pop %v252
      %v254 = vmul.f32 %v172, 1.442695
      %v255 = vpow.pop %v254
      %v256 = vmul.f32 %v173, 1.442695
      %v257 = vpow.pop %v256
      %v258 = vmul.f32 %v174, 1.442695
      %v259 = vpow.pop %v258
      %v260 = vmul.f32 %v175, 1.442695
      %v261 = vpow.pop %v260
      %v262 = vmul.f32 %v176, 1.442695
      %v263 = vpow.pop %v262
      %v264 = vmul.f32 %v177, 1.442695
      %v265 = vpow.pop %v264
      %v266 = vmul.f32 %v178, 1.442695
      %v267 = vpow.pop %v266
      %v268 = vmul.f32 %v179, 1.442695
      %v269 = vpow.pop %v268
      %v270 = vmul.f32 %v180, 1.442695
      %v271 = vpow.pop %v270
      %v272 = vmul.f32 %v181, 1.442695
      %v273 = vpow.pop %v272
      %v274 = vmul.f32 %v182, 1.442695
      %v275 = vpow.pop %v274
      %v276 = vsel %vm190, 1, 0
      %v277 = vsel %vm191, 1, 0
      %vm278 = vcmp.eq.s32.totalorder %v276, 1
      %vm279 = vcmp.eq.s32.totalorder %v277, 1
      %v280 = vsel %vm278, %v253, %v240
      %v281 = vsel %vm278, %v255, %v241
      %v282 = vsel %vm279, %v257, %v242
      %v283 = vsel %vm279, %v259, %v243
      %v284 = vsel %vm278, %v261, %v244
      %v285 = vsel %vm278, %v263, %v245
      %v286 = vsel %vm279, %v265, %v246
      %v287 = vsel %vm279, %v267, %v247
      %v288 = vsel %vm278, %v269, %v248
      %v289 = vsel %vm278, %v271, %v249
      %v290 = vsel %vm279, %v273, %v250
      %v291 = vsel %vm279, %v275, %v251
      %v292 = vld [vmem:[%s1] sm:$0xff]
      %v293 = vld [vmem:[%s1 + $0x8] sm:$0x1]
      %v294 = vld [vmem:[%s1 + $0x10] sm:$0xff]
      %v295 = vld [vmem:[%s1 + $0x18] sm:$0x1]
      %v296 = vld [vmem:[%s1 + $0x20] sm:$0xff]
      %v297 = vld [vmem:[%s1 + $0x28] sm:$0x1]
      %299 = vset.pattern.permute.xlu0 0
      %300 = vperm.xlu0 %299, %v292
      %v301 = vpop.permute.xlu0 %300
      %304 = vset.pattern.permute.xlu0 0
      %305 = vperm.xlu0 %304, %v293
      %v306 = vpop.permute.xlu0 %305
      %309 = vset.pattern.permute.xlu0 0
      %310 = vperm.xlu0 %309, %v294
      %v311 = vpop.permute.xlu0 %310
      %314 = vset.pattern.permute.xlu0 0
      %315 = vperm.xlu0 %314, %v295
      %v316 = vpop.permute.xlu0 %315
      %319 = vset.pattern.permute.xlu0 0
      %320 = vperm.xlu0 %319, %v296
      %v321 = vpop.permute.xlu0 %320
      %324 = vset.pattern.permute.xlu0 0
      %325 = vperm.xlu0 %324, %v297
      %v326 = vpop.permute.xlu0 %325
      %v328 = vmul.f32 %v280, %v301
      %v329 = vmul.f32 %v281, %v301
      %v330 = vmul.f32 %v282, %v306
      %v331 = vmul.f32 %v283, %v306
      %v332 = vmul.f32 %v284, %v311
      %v333 = vmul.f32 %v285, %v311
      %v334 = vmul.f32 %v286, %v316
      %v335 = vmul.f32 %v287, %v316
      %v336 = vmul.f32 %v288, %v321
      %v337 = vmul.f32 %v289, %v321
      %v338 = vmul.f32 %v290, %v326
      %v339 = vmul.f32 %v291, %v326
      %v340 = vld [vmem:[%s2] sm:$0xff]
      %v341 = vld [vmem:[%s2 + $0x8] sm:$0xff]
      %v342 = vld [vmem:[%s2 + $0x10] sm:$0x1]
      %v343 = vld [vmem:[%s2 + $0x18] sm:$0x1]
      %v344 = vadd.f32 %v328, %v340
      %v345 = vadd.f32 %v329, %v341
      %v346 = vadd.f32 %v330, %v342
      %v347 = vadd.f32 %v331, %v343
      %v348 = vadd.f32 %v332, %v340
      %v349 = vadd.f32 %v333, %v341
      %v350 = vadd.f32 %v334, %v342
      %v351 = vadd.f32 %v335, %v343
      %v352 = vadd.f32 %v336, %v340
      %v353 = vadd.f32 %v337, %v341
      %v354 = vadd.f32 %v338, %v342
      %v355 = vadd.f32 %v339, %v343
      %356 = vst [vmem:[%s170] sm:$0xff] %v344
      %357 = vst [vmem:[%s170 + $0x8] sm:$0xff] %v345
      %358 = vst [vmem:[%s170 + $0x10] sm:$0x1] %v346
      %359 = vst [vmem:[%s170 + $0x18] sm:$0x1] %v347
      %360 = vst [vmem:[%s170 + $0x20] sm:$0xff] %v348
      %361 = vst [vmem:[%s170 + $0x28] sm:$0xff] %v349
      %362 = vst [vmem:[%s170 + $0x30] sm:$0x1] %v350
      %363 = vst [vmem:[%s170 + $0x38] sm:$0x1] %v351
      %364 = vst [vmem:[%s170 + $0x40] sm:$0xff] %v352
      %365 = vst [vmem:[%s170 + $0x48] sm:$0xff] %v353
      %366 = vst [vmem:[%s170 + $0x50] sm:$0x1] %v354
      %367 = vst [vmem:[%s170 + $0x58] sm:$0x1] %v355
      %p368 = scmp.lt.s32.totalorder %s14, 1
      %s369 = scalar_select %p368, %s14, 1
      %s370 = smul.addr %s369, 12
      %s371 = smul.addr %s370, 8
      %s372 = scalar_lea.vmem %s3, %s371
      // Predicated region
      $region33: #{tpu_custom_call.1} parent=31 // pred_check
        %p373 = pneg %p100
      $region34: #{tpu_custom_call.1} parent=31 // pred_check_branch
        %375 = sbr.rel (%p373) target = $region36
      $region35: #{tpu_custom_call.1} parent=31 // pred_region
        _
      $region36: #{tpu_custom_call.1} parent=31 // pred_fallthru
        _
    $region32: #{tpu_custom_call.1} parent=5 // pred_fallthru
      _
    %p376 = scmp.le.s32.totalorder 2, %s9
    // Predicated region
    $region37: #{tpu_custom_call.1} parent=5 // pred_check
      %p377 = pneg %p376
    $region38: #{tpu_custom_call.1} parent=5 // pred_check_branch
      %379 = sbr.rel (%p377) target = $region40
    $region39: #{tpu_custom_call.1} parent=5 // pred_region
      %s380 = ssub.s32 %s9, 2
      // Predicated region
      $region41: #{tpu_custom_call.1} parent=39 // pred_check
        %p381 = pneg %p106
      $region42: #{tpu_custom_call.1} parent=39 // pred_check_branch
        %383 = sbr.rel (%p381) target = $region44
      $region43: #{tpu_custom_call.1} parent=39 // pred_region
        %p384 = scmp.lt.s32.totalorder %s15, 1
        %s385 = scalar_select %p384, %s15, 1
        %s386 = smul.addr %s385, 12
        %s387 = smul.addr %s386, 8
        %s388 = scalar_lea.vmem %s3, %s387
      $region44: #{tpu_custom_call.1} parent=39 // pred_fallthru
        _
    $region40: #{tpu_custom_call.1} parent=5 // pred_fallthru
      _
  $region6: #{tpu_custom_call.1} parent=0 // loop_footer
    %s13 = sadd.s32 1, %s9
  $region7: #{tpu_custom_call.1} parent=0 // loop_footer_branch
    %8 = sbr.rel target = $region3
  $region8: #{tpu_custom_call.1} parent=0 // loop_exit
    _

</llo_original>
